<compile_context>
chip_gen: v7x
topology: tpu7x:2x2x1
jax: 0.10.0
libtpu: 0.0.40
codegen_flags: <defaults>
</compile_context>

<pallas_src>
import functools
import math

import jax
import jax.numpy as jnp
from jax import lax
from jax.experimental import pallas as pl
from jax.experimental.pallas import tpu as pltpu


_INV_SQRT2 = 1.0 / math.sqrt(2.0)


def _gelu(x, approx):
    if approx:
        # tanh approximation: EUP-friendly fast path on v6e/v7x (~1e-3 off erf).
        return jax.nn.gelu(x, approximate=True)
    # torch.nn.GELU() default: 0.5 * x * (1 + erf(x / sqrt(2)))
    return 0.5 * x * (1.0 + lax.erf(x * _INV_SQRT2))


def _round_up(n, m):
    return ((n + m - 1) // m) * m


def _round_down(n, m):
    return max(m, (n // m) * m)


def _sublane_multiple(dtype):
    # f32 -> 8, bf16/f16 -> 16, int8/fp8 -> 32
    return max(8, 32 // jnp.dtype(dtype).itemsize)


def _vmem_capacity_bytes():
    """Per-TensorCore VMEM capacity (generation-aware), conservative fallback."""
    try:
        info = pltpu.get_tpu_info()
        for attr in ("vmem_capacity_bytes", "vmem_bytes", "vmem_size_bytes"):
            v = getattr(info, attr, None)
            if v:
                return int(v)
    except Exception:
        pass
    return 64 << 20  # v7x per-TC size; safe lower bound for all targets


def _block_spec(shape, index_map, *, buffers=None):
    """BlockSpec, optionally with an explicit buffer count.

    Grid-invariant blocks (resident weights/biases) are single-buffered so
    they do not pay 2x VMEM. Falls back if pipeline_mode is unsupported.
    """
    if buffers is not None:
        try:
            return pl.BlockSpec(shape, index_map,
                                pipeline_mode=pl.Buffered(buffers))
        except (TypeError, AttributeError):
            pass
    return pl.BlockSpec(shape, index_map)


def _largest_aligned_divisor(H, upper, align=128):
    """Largest divisor of H that is a multiple of `align` and <= upper."""
    best = None
    for d in range(align, H + 1, align):
        if H % d == 0 and d <= upper:
            best = d
    return best


# --------------------------------------------------------------------------
# Kernels
# --------------------------------------------------------------------------

def _mlp_kernel_resident(x_ref, w1_ref, b1_ref, w2_ref, b2_ref, o_ref, *,
                         approx_gelu, hc):
    """Single hidden step: weights fully resident, no accumulator scratch."""
    x = x_ref[...]
    H = w1_ref.shape[1]

    acc = None
    for lo in range(0, H, hc):
        sz = min(hc, H - lo)
        # Native-dtype MXU operands, f32 accumulation.
        h = jnp.dot(x, w1_ref[:, lo:lo + sz],
                    preferred_element_type=jnp.float32)
        h = _gelu(h + b1_ref[:, lo:lo + sz].astype(jnp.float32), approx_gelu)
        p = jnp.dot(h.astype(w2_ref.dtype), w2_ref[lo:lo + sz, :],
                    preferred_element_type=jnp.float32)
        acc = p if acc is None else acc + p

    y = acc + b2_ref[...].astype(jnp.float32)
    # Dropout: inference mode / p=0.0 => identity.
    # TODO(synk): training-mode dropout via pltpu.prng_seed / prng_random_bits.
    o_ref[...] = y.astype(o_ref.dtype)


def _mlp_kernel_streamed(x_ref, w1_ref, b1_ref, w2_ref, b2_ref, o_ref,
                         acc_ref, *, approx_gelu, hc):
    """Hidden axis streamed across the grid; accumulate into f32 VMEM scratch."""
    hk = pl.program_id(1)
    x = x_ref[...]
    th = w1_ref.shape[1]

    part = None
    for lo in range(0, th, hc):
        sz = min(hc, th - lo)
        h = jnp.dot(x, w1_ref[:, lo:lo + sz],
                    preferred_element_type=jnp.float32)
        h = _gelu(h + b1_ref[:, lo:lo + sz].astype(jnp.float32), approx_gelu)
        p = jnp.dot(h.astype(w2_ref.dtype), w2_ref[lo:lo + sz, :],
                    preferred_element_type=jnp.float32)
        part = p if part is None else part + p

    @pl.when(hk == 0)
    def _():
        acc_ref[...] = part

    @pl.when(hk > 0)
    def _():
        acc_ref[...] += part

    @pl.when(hk == pl.num_programs(1) - 1)
    def _():
        y = acc_ref[...] + b2_ref[...].astype(jnp.float32)
        o_ref[...] = y.astype(o_ref.dtype)


# --------------------------------------------------------------------------
# Wrapper
# --------------------------------------------------------------------------

@functools.partial(jax.jit, static_argnames=("tm", "th", "hc", "approx_gelu"))
def mlp_forward(x, w1_t, b1, w2_t, b2, *, tm=256, th=None, hc=512,
                approx_gelu=False):
    """Fused GPT MLP forward.

    x: [B, T, C]; w1_t: [C, 4C] (c_fc.weight.T); b1: [4C];
    w2_t: [4C, C] (c_proj.weight.T); b2: [C]. Returns [B, T, C].

    approx_gelu=True (tanh) is the recommended fast path on v6e/v7x; the
    default matches torch.nn.GELU() exact-erf semantics.
    """
    B, T, C = x.shape
    H = w1_t.shape[1]
    M = B * T

    x2 = x.reshape(M, C)
    b1_2 = b1.reshape(1, H)
    b2_2 = b2.reshape(1, C)

    x_isz = jnp.dtype(x.dtype).itemsize
    w_isz = jnp.dtype(w1_t.dtype).itemsize
    b_isz = jnp.dtype(b1.dtype).itemsize
    sub = _sublane_multiple(x.dtype)

    capacity = _vmem_capacity_bytes()
    headroom = 10 << 20

    def clamp_tm(req):
        if M <= int(req):
            return M  # full-extent block along M is always legal
        return _round_down(min(int(req), M), sub)

    def nonweight_bytes(tm_e, hc_e, with_acc_scratch):
        io = 4 * tm_e * C * x_isz            # double-buffered x + out tiles
        inter = 2 * tm_e * hc_e * 4          # live f32 GELU chunk (+ its cast)
        local = tm_e * C * 4                 # live f32 accumulator value
        scr = tm_e * C * 4 if with_acc_scratch else 0
        return io + inter + local + scr

    tm_eff = clamp_tm(tm)
    # v7x has 2 TensorCores: make sure the "parallel" m-axis has >= 2 tiles
    # when M is large enough (one extra grid step is ~free on v5e/v6e).
    if M >= 256 and pl.cdiv(M, tm_eff) < 2:
        tm_eff = clamp_tm(_round_up(pl.cdiv(M, 2), sub))

    hc_eff = max(128, _round_down(min(int(hc), max(H, 128)), 128))

    resident_w_bytes = 2 * C * H * w_isz + (H + C) * b_isz

    if th is not None:
        th_eff = min(int(th), H)
        resident = th_eff >= H
    else:
        resident = (nonweight_bytes(tm_eff, min(hc_eff, H), False)
                    + resident_w_bytes + headroom) <= capacity
        if resident:
            th_eff = H
        else:
            # Streamed weights: prefer a bigger m-tile (fewer HBM weight
            # re-fetches), then the largest aligned hidden tile that fits.
            chosen = None
            for tm_try in sorted({max(512, int(tm)), tm_eff}, reverse=True):
                tm_c = clamp_tm(tm_try)
                budget_w = (capacity - headroom
                            - nonweight_bytes(tm_c, hc_eff, True))
                # double-buffered: 2 bufs * (W1 col-block + W2 row-block)
                th_cap = budget_w // max(1, 4 * C * w_isz)
                th_c = _largest_aligned_divisor(H, th_cap)
                if th_c is not None and th_c >= 256:
                    chosen = (tm_c, th_c)
                    break
            if chosen is None:
                tm_c = clamp_tm(tm)
                budget_w = (capacity - headroom
                            - nonweight_bytes(tm_c, hc_eff, True))
                th_c = _largest_aligned_divisor(
                    H, budget_w // max(1, 4 * C * w_isz))
                chosen = (tm_c, th_c if th_c is not None else H)
            tm_eff, th_eff = chosen
            resident = th_eff >= H

    n_m = pl.cdiv(M, tm_eff)
    n_h = 1 if resident else pl.cdiv(H, th_eff)

    if resident:
        need = (nonweight_bytes(tm_eff, min(hc_eff, H), False)
                + resident_w_bytes)
    else:
        need = (nonweight_bytes(tm_eff, min(hc_eff, th_eff), True)
                + 2 * (2 * C * th_eff * w_isz + (th_eff + C) * b_isz))
    vmem_limit = int(max(24 << 20,
                         min(capacity - (4 << 20),
                             max(need + (8 << 20), 32 << 20))))

    weight_bytes = 2 * C * H * w_isz + (H + C) * b_isz
    cost = pl.CostEstimate(
        flops=4 * M * C * H,                 # two matmuls, 2*M*C*H each
        transcendentals=M * H,               # one gelu activation per element
        bytes_accessed=int(M * C * x_isz            # x in
                           + M * C * x_isz          # y out
                           + (weight_bytes if resident
                              else n_m * weight_bytes)),  # streamed re-fetch
    )

    if resident:
        kernel = functools.partial(_mlp_kernel_resident,
                                   approx_gelu=approx_gelu, hc=hc_eff)
        out2 = pl.pallas_call(
            kernel,
            out_shape=jax.ShapeDtypeStruct((M, C), x.dtype),
            grid_spec=pltpu.PrefetchScalarGridSpec(
                num_scalar_prefetch=0,
                grid=(n_m,),
                in_specs=[
                    pl.BlockSpec((tm_eff, C), lambda i: (i, 0)),        # x tile
                    _block_spec((C, H), lambda i: (0, 0), buffers=1),   # W1^T
                    _block_spec((1, H), lambda i: (0, 0), buffers=1),   # b1
                    _block_spec((H, C), lambda i: (0, 0), buffers=1),   # W2^T
                    _block_spec((1, C), lambda i: (0, 0), buffers=1),   # b2
                ],
                out_specs=pl.BlockSpec((tm_eff, C), lambda i: (i, 0)),
            ),
            compiler_params=pltpu.CompilerParams(
                dimension_semantics=("parallel",),
                vmem_limit_bytes=vmem_limit),
            cost_estimate=cost,
        )(x2, w1_t, b1_2, w2_t, b2_2)
    else:
        kernel = functools.partial(_mlp_kernel_streamed,
                                   approx_gelu=approx_gelu, hc=hc_eff)
        out2 = pl.pallas_call(
            kernel,
            out_shape=jax.ShapeDtypeStruct((M, C), x.dtype),
            grid_spec=pltpu.PrefetchScalarGridSpec(
                num_scalar_prefetch=0,
                grid=(n_m, n_h),
                in_specs=[
                    pl.BlockSpec((tm_eff, C), lambda i, k: (i, 0)),      # x
                    pl.BlockSpec((C, th_eff), lambda i, k: (0, k)),      # W1^T
                    pl.BlockSpec((1, th_eff), lambda i, k: (0, k)),      # b1
                    pl.BlockSpec((th_eff, C), lambda i, k: (k, 0)),      # W2^T
                    _block_spec((1, C), lambda i, k: (0, 0), buffers=1), # b2
                ],
                out_specs=pl.BlockSpec((tm_eff, C), lambda i, k: (i, 0)),
                scratch_shapes=[pltpu.VMEM((tm_eff, C), jnp.float32)],
            ),
            compiler_params=pltpu.CompilerParams(
                dimension_semantics=("parallel", "arbitrary"),
                vmem_limit_bytes=vmem_limit),
            cost_estimate=cost,
        )(x2, w1_t, b1_2, w2_t, b2_2)

    return out2.reshape(B, T, C)


def _reference(x, w1_t, b1, w2_t, b2, approx=False):
    xf = x.astype(jnp.float32)
    h = xf @ w1_t.astype(jnp.float32) + b1.astype(jnp.float32)
    if approx:
        h = jax.nn.gelu(h, approximate=True)
    else:
        h = 0.5 * h * (1.0 + lax.erf(h * _INV_SQRT2))
    return h @ w2_t.astype(jnp.float32) + b2.astype(jnp.float32)


if __name__ == "__main__":
    key = jax.random.PRNGKey(0)

    # ---- Config 1: batch=2, seq=8, n_embd=32 (hidden=128) -> resident path.
    B, T, C = 2, 8, 32
    H = 4 * C
    kx, kw1, kb1, kw2, kb2, k2 = jax.random.split(key, 6)

    x = jax.random.normal(kx, (B, T, C), dtype=jnp.float32)
    w1_t = jax.random.normal(kw1, (C, H), dtype=jnp.float32) / math.sqrt(C)
    b1 = jax.random.normal(kb1, (H,), dtype=jnp.float32) * 0.02
    w2_t = jax.random.normal(kw2, (H, C), dtype=jnp.float32) / math.sqrt(H)
    b2 = jax.random.normal(kb2, (C,), dtype=jnp.float32) * 0.02

    out = jax.block_until_ready(mlp_forward(x, w1_t, b1, w2_t, b2))
    ref = _reference(x, w1_t, b1, w2_t, b2)
    assert out.shape == (B, T, C), out.shape
    assert jnp.allclose(out.astype(jnp.float32), ref, atol=1e-4, rtol=1e-4), (
        float(jnp.max(jnp.abs(out.astype(jnp.float32) - ref))))

    # bf16 fast path (native-dtype MXU operands, tanh GELU on the EUP).
    xb = x.astype(jnp.bfloat16)
    w1b = w1_t.astype(jnp.bfloat16)
    w2b = w2_t.astype(jnp.bfloat16)
    out_b = jax.block_until_ready(
        mlp_forward(xb, w1b, b1, w2b, b2, approx_gelu=True))
    ref_b = _reference(xb, w1b, b1, w2b, b2, approx=True)
    assert out_b.dtype == jnp.bfloat16
    assert jnp.allclose(out_b.astype(jnp.float32), ref_b,
                        atol=5e-2, rtol=5e-2), (
        float(jnp.max(jnp.abs(out_b.astype(jnp.float32) - ref_b))))

    # ---- Config 2: n_embd=64 (hidden=256), forced th=128 -> streamed path.
    C2 = 64
    H2 = 4 * C2
    kx2, kw12, kb12, kw22, kb22 = jax.random.split(k2, 5)
    x2 = jax.random.normal(kx2, (B, T, C2), dtype=jnp.float32)
    w1_t2 = jax.random.normal(kw12, (C2, H2), dtype=jnp.float32) / math.sqrt(C2)
    b1_2 = jax.random.normal(kb12, (H2,), dtype=jnp.float32) * 0.02
    w2_t2 = jax.random.normal(kw22, (H2, C2), dtype=jnp.float32) / math.sqrt(H2)
    b2_2 = jax.random.normal(kb22, (C2,), dtype=jnp.float32) * 0.02

    out2 = jax.block_until_ready(
        mlp_forward(x2, w1_t2, b1_2, w2_t2, b2_2, th=128))
    ref2 = _reference(x2, w1_t2, b1_2, w2_t2, b2_2)
    assert jnp.allclose(out2.astype(jnp.float32), ref2, atol=1e-4, rtol=1e-4), (
        float(jnp.max(jnp.abs(out2.astype(jnp.float32) - ref2))))

    print("KERNEL_OK")
</pallas_src>

<mosaic_0001>
module attributes {stable_mosaic.version = 11 : i64} {
  func.func @_mlp_kernel_resident(%arg0: i32, %arg1: memref<16x32xf32, #tpu.memory_space<vmem>>, %arg2: memref<32x128xf32, #tpu.memory_space<vmem>>, %arg3: memref<1x128xf32, #tpu.memory_space<vmem>>, %arg4: memref<128x32xf32, #tpu.memory_space<vmem>>, %arg5: memref<1x32xf32, #tpu.memory_space<vmem>>, %arg6: memref<16x32xf32, #tpu.memory_space<vmem>>) attributes {dimension_semantics = [#tpu.dimension_semantics<parallel>], iteration_bounds = array<i64: 1>, scalar_prefetch = 0 : i64, scratch_operands = 0 : i64, tpu.core_type = #tpu.core_type<tc>, window_params = [{transform_indices = @transform_0, window_bounds = array<i64: 16, 32>}, {pipeline_mode = #tpu.pipeline_mode<synchronous>, transform_indices = @transform_1, window_bounds = array<i64: 32, 128>}, {pipeline_mode = #tpu.pipeline_mode<synchronous>, transform_indices = @transform_2, window_bounds = array<i64: 1, 128>}, {pipeline_mode = #tpu.pipeline_mode<synchronous>, transform_indices = @transform_3, window_bounds = array<i64: 128, 32>}, {pipeline_mode = #tpu.pipeline_mode<synchronous>, transform_indices = @transform_4, window_bounds = array<i64: 1, 32>}, {transform_indices = @transform_5, window_bounds = array<i64: 16, 32>}]} {
    %c0 = arith.constant 0 : index
    %c0_0 = arith.constant 0 : index
    %0 = vector.load %arg1[%c0, %c0_0] : memref<16x32xf32, #tpu.memory_space<vmem>>, vector<16x32xf32>
    %c0_1 = arith.constant 0 : index
    %c0_2 = arith.constant 0 : index
    %1 = vector.load %arg2[%c0_1, %c0_2] : memref<32x128xf32, #tpu.memory_space<vmem>>, vector<32x128xf32>
    %cst = arith.constant dense<0.000000e+00> : vector<16x128xf32>
    %2 = tpu.matmul %0, %1, %cst {dimension_numbers = #tpu.dot_dimension_numbers<[1], [0], [0], [1], [0, 0, 1, 1], [], []>} : vector<16x32xf32>, vector<32x128xf32>, vector<16x128xf32> -> vector<16x128xf32>
    %c0_3 = arith.constant 0 : index
    %c0_4 = arith.constant 0 : index
    %3 = vector.load %arg3[%c0_3, %c0_4] : memref<1x128xf32, #tpu.memory_space<vmem>>, vector<1x128xf32>
    %4 = vector.broadcast %3 : vector<1x128xf32> to vector<16x128xf32>
    %5 = arith.addf %2, %4 : vector<16x128xf32>
    %cst_5 = arith.constant 5.000000e-01 : f32
    %6 = vector.broadcast %cst_5 : f32 to vector<16x128xf32>
    %7 = arith.mulf %6, %5 : vector<16x128xf32>
    %cst_6 = arith.constant 0.707106769 : f32
    %8 = vector.broadcast %cst_6 : f32 to vector<16x128xf32>
    %9 = arith.mulf %5, %8 : vector<16x128xf32>
    %10 = math.erf %9 : vector<16x128xf32>
    %cst_7 = arith.constant 1.000000e+00 : f32
    %11 = vector.broadcast %cst_7 : f32 to vector<16x128xf32>
    %12 = arith.addf %11, %10 : vector<16x128xf32>
    %13 = arith.mulf %7, %12 : vector<16x128xf32>
    %c0_8 = arith.constant 0 : index
    %c0_9 = arith.constant 0 : index
    %14 = vector.load %arg4[%c0_8, %c0_9] : memref<128x32xf32, #tpu.memory_space<vmem>>, vector<128x32xf32>
    %cst_10 = arith.constant dense<0.000000e+00> : vector<16x32xf32>
    %15 = tpu.matmul %13, %14, %cst_10 {dimension_numbers = #tpu.dot_dimension_numbers<[1], [0], [0], [1], [0, 0, 1, 1], [], []>} : vector<16x128xf32>, vector<128x32xf32>, vector<16x32xf32> -> vector<16x32xf32>
    %c0_11 = arith.constant 0 : index
    %c0_12 = arith.constant 0 : index
    %16 = vector.load %arg5[%c0_11, %c0_12] : memref<1x32xf32, #tpu.memory_space<vmem>>, vector<1x32xf32>
    %17 = vector.broadcast %16 : vector<1x32xf32> to vector<16x32xf32>
    %18 = arith.addf %15, %17 : vector<16x32xf32>
    %c0_13 = arith.constant 0 : index
    %c0_14 = arith.constant 0 : index
    %19 = vector.load %arg6[%c0_13, %c0_14] : memref<16x32xf32, #tpu.memory_space<vmem>>, vector<16x32xf32>
    tpu.vector_store %arg6[%c0_13, %c0_14], %18 {strides = array<i32>} : memref<16x32xf32, #tpu.memory_space<vmem>>, vector<16x32xf32>,
    return
  }
  func.func @transform_0(%arg0: i32) -> (i32, i32) {
    %c0_i32 = arith.constant 0 : i32
    %c0_i32_0 = arith.constant 0 : i32
    return %arg0, %c0_i32 : i32, i32
  }
  func.func @transform_1(%arg0: i32) -> (i32, i32) {
    %c0_i32 = arith.constant 0 : i32
    %c0_i32_0 = arith.constant 0 : i32
    %c0_i32_1 = arith.constant 0 : i32
    return %c0_i32, %c0_i32_0 : i32, i32
  }
  func.func @transform_2(%arg0: i32) -> (i32, i32) {
    %c0_i32 = arith.constant 0 : i32
    %c0_i32_0 = arith.constant 0 : i32
    %c0_i32_1 = arith.constant 0 : i32
    return %c0_i32, %c0_i32_0 : i32, i32
  }
  func.func @transform_3(%arg0: i32) -> (i32, i32) {
    %c0_i32 = arith.constant 0 : i32
    %c0_i32_0 = arith.constant 0 : i32
    %c0_i32_1 = arith.constant 0 : i32
    return %c0_i32, %c0_i32_0 : i32, i32
  }
  func.func @transform_4(%arg0: i32) -> (i32, i32) {
    %c0_i32 = arith.constant 0 : i32
    %c0_i32_0 = arith.constant 0 : i32
    %c0_i32_1 = arith.constant 0 : i32
    return %c0_i32, %c0_i32_0 : i32, i32
  }
  func.func @transform_5(%arg0: i32) -> (i32, i32) {
    %c0_i32 = arith.constant 0 : i32
    %c0_i32_0 = arith.constant 0 : i32
    return %arg0, %c0_i32 : i32, i32
  }
}

</mosaic_0001>

<llo_original>
// kernel: mlp_forward.1
$region0: #{mlp_forward.1}
  #allocation0 [shape = 'u32[]', space=smem, size = 0x4, offset = 0x4, fixed_abs, tag = 'smem constant byte address 0x4 - core index']
  #allocation1 [shape = 'u32[144,128]{1,0:T(1,128)}', space=vmem, size = 0x12000, scoped, tag = 'internal scratch']
  %s0 = inlined_call_operand.vmem [shape: f32[16,32], index: 0, kind: input, shape index: {}]
  %s1 = inlined_call_operand.vmem [shape: f32[32,128], index: 1, kind: input, shape index: {}]
  %s2 = inlined_call_operand.vmem [shape: f32[1,128], index: 2, kind: input, shape index: {}]
  %s3 = inlined_call_operand.vmem [shape: f32[128,32], index: 3, kind: input, shape index: {}]
  %s4 = inlined_call_operand.vmem [shape: f32[1,32], index: 4, kind: input, shape index: {}]
  %s5 = inlined_call_operand.hbm [shape: f32[16,32], index: 5, kind: output, shape index: {}]
  %s6 = sld [smem:[#allocation0]]
  $region30: #{mlp_forward.1} parent=0
    _
  %s8 = ssub.s32 1, %s6
  %s9 = scalar_select 0, %s8, %s6
  $region1: #{mlp_forward.1} parent=0
    #allocation2 [shape = 'u8[8192]{0}', space=vmem, size = 0x2000, scoped, tag = 'output window, operand 0, single buffered']
    #allocation3 [shape = 's32[1]{0}', space=sflag, size = 0x4, scoped, tag = 'scoped memory for mlp_forward.1']
    %10 = vsyncpa [#allocation3], 0
    // Predicated region
    $region2: #{mlp_forward.1} parent=1 // pred_check
      _
    $region3: #{mlp_forward.1} parent=1 // pred_check_branch
      %12 = sbr.rel (0) target = $region5
    $region4: #{mlp_forward.1} parent=1 // pred_region
      _
    $region5: #{mlp_forward.1} parent=1 // pred_fallthru
      _
    // Predicated region
    $region6: #{mlp_forward.1} parent=1 // pred_check
      _
    $region7: #{mlp_forward.1} parent=1 // pred_check_branch
      %14 = sbr.rel (0) target = $region9
    $region8: #{mlp_forward.1} parent=1 // pred_region
      _
    $region9: #{mlp_forward.1} parent=1 // pred_fallthru
      _
    // Predicated region
    $region10: #{mlp_forward.1} parent=1 // pred_check
      _
    $region11: #{mlp_forward.1} parent=1 // pred_check_branch
      %16 = sbr.rel (0) target = $region13
    $region12: #{mlp_forward.1} parent=1 // pred_region
      _
    $region13: #{mlp_forward.1} parent=1 // pred_fallthru
      _
    // Predicated region
    $region14: #{mlp_forward.1} parent=1 // pred_check
      _
    $region15: #{mlp_forward.1} parent=1 // pred_check_branch
      %18 = sbr.rel (0) target = $region17
    $region16: #{mlp_forward.1} parent=1 // pred_region
      _
    $region17: #{mlp_forward.1} parent=1 // pred_fallthru
      _
    // Predicated region
    $region18: #{mlp_forward.1} parent=1 // pred_check
      _
    $region19: #{mlp_forward.1} parent=1 // pred_check_branch
      %20 = sbr.rel (0) target = $region21
    $region20: #{mlp_forward.1} parent=1 // pred_region
      _
    $region21: #{mlp_forward.1} parent=1 // pred_fallthru
      _
    %v21 = vld [vmem:[%s0] sm:$0xff]
    %v22 = vld [vmem:[%s0 + $0x8] sm:$0xff]
    %v23 = vld [vmem:[%s1] sm:$0xff]
    %v24 = vld [vmem:[%s1 + $0x8] sm:$0xff]
    %v25 = vld [vmem:[%s1 + $0x10] sm:$0xff]
    %v26 = vld [vmem:[%s1 + $0x18] sm:$0xff]
    %v27 = vld [vmem:[%s2] sm:$0x1]
    %v29 = vlaneseq
    %v30 = vshrl.u32 %v29, 7
    %v31 = vsub.s32 0, %v30
    %v32 = vrot.slane %v27, %v31
    %vm34 = vcmask 261120
    %v36 = vsel %vm34, %v21, 0
    %v39 = vsel %vm34, %v22, 0
    %41 = vmatprep.subr.mxu0 0.0
    %42 = vmatpush1.msra.mxu0 %v23
    %43 = vmatprep.subr.mxu0 0.0
    %44 = vmatpush1.msra.mxu0 %v24
    %45 = vmatprep.subr.mxu0 0.0
    %46 = vmatpush1.msra.mxu0 %v25
    %47 = vmatprep.subr.mxu0 0.0
    %48 = vmatpush1.msra.mxu0 %v26
    %49 = vmatprep.subr.mxu0 0.0
    %50 = vmatpush1.msra.mxu0 0.0
    %51 = vmatprep.subr.mxu0 0.0
    %52 = vmatpush1.msra.mxu0 0.0
    %53 = vmatprep.subr.mxu0 0.0
    %54 = vmatpush1.msra.mxu0 0.0
    %55 = vmatprep.subr.mxu0 0.0
    %56 = vmatpush1.msra.mxu0 0.0
    %57 = vmatprep.subr.mxu0 0.0
    %58 = vmatpush1.msra.mxu0 0.0
    %59 = vmatprep.subr.mxu0 0.0
    %60 = vmatpush1.msra.mxu0 0.0
    %61 = vmatprep.subr.mxu0 0.0
    %62 = vmatpush1.msra.mxu0 0.0
    %63 = vmatprep.subr.mxu0 0.0
    %64 = vmatpush1.msra.mxu0 0.0
    %65 = vmatprep.subr.mxu0 0.0
    %66 = vmatpush1.msra.mxu0 0.0
    %67 = vmatprep.subr.mxu0 0.0
    %68 = vmatpush1.msra.mxu0 0.0
    %69 = vmatprep.subr.mxu0 0.0
    %70 = vmatpush1.msra.mxu0 0.0
    %71 = vmatprep.subr.mxu0 0.0
    %72 = vmatpush1.msra.mxu0 0.0
    %73 = vmatprep.subr.mxu0 0.0
    %74 = vmatpush1.msra.mxu0 0.0
    %75 = vmatprep.subr.mxu0 0.0
    %76 = vmatpush1.msra.mxu0 0.0
    %77 = vmatprep.subr.mxu0 0.0
    %78 = vmatpush1.msra.mxu0 0.0
    %79 = vmatprep.subr.mxu0 0.0
    %80 = vmatpush1.msra.mxu0 0.0
    %81 = vmatprep.subr.mxu0 0.0
    %82 = vmatpush1.msra.mxu0 0.0
    %83 = vmatprep.subr.mxu0 0.0
    %84 = vmatpush1.msra.mxu0 0.0
    %85 = vmatprep.subr.mxu0 0.0
    %86 = vmatpush1.msra.mxu0 0.0
    %87 = vmatprep.subr.mxu0 0.0
    %88 = vmatpush1.msra.mxu0 0.0
    %89 = vmatprep.subr.mxu0 0.0
    %90 = vmatpush1.msra.mxu0 0.0
    %91 = vmatprep.subr.mxu0 0.0
    %92 = vmatpush1.msra.mxu0 0.0
    %93 = vmatprep.subr.mxu0 0.0
    %94 = vmatpush1.msra.mxu0 0.0
    %95 = vmatprep.subr.mxu0 0.0
    %96 = vmatpush1.msra.mxu0 0.0
    %97 = vmatprep.subr.mxu0 0.0
    %98 = vmatpush1.msra.mxu0 0.0
    %99 = vmatprep.subr.mxu0 0.0
    %100 = vmatpush1.msra.mxu0 0.0
    %101 = vmatprep.subr.mxu0 0.0
    %102 = vmatpush1.msra.mxu0 0.0
    %103 = vmatprep.subr.mxu0 0.0
    %104 = vmatpush1.msra.mxu0 0.0
    %105 = vmatprep.mubr.f32.mxu0 0.0
    %106 = vmatmul.mubr.f32.gmra.mrb[0].mxu0 %v36
    %v107 = vpop.f32.mrb[0].mxu0
    %v108 = vadd.f32 %v32, %v107
    %v109 = vpop.f32.mrb[0].mxu0
    %110 = vmatprep.mubr.f32.mxu0 0.0
    %111 = vmatmul.mubr.f32.gmra.mrb[0].mxu0 %v39
    %v112 = vpop.f32.mrb[0].mxu0
    %v113 = vadd.f32 %v32, %v112
    %v114 = vpop.f32.mrb[0].mxu0
    %115 = vdwg.mxu0
    %v116 = vmul.f32 %v108, 0.5
    %v117 = vmul.f32 %v113, 0.5
    %v118 = vmul.f32 %v108, 0.70710677
    %v119 = vmul.f32 %v113, 0.70710677
    %v120 = verf.f32.pop %v118
    %v121 = verf.f32.pop %v119
    %v122 = vadd.f32 %v120, 1.0
    %v123 = vadd.f32 %v121, 1.0
    %v124 = vmul.f32 %v116, %v122
    %v125 = vmul.f32 %v117, %v123
    %v126 = vld [vmem:[%s3] sm:$0xff]
    %v127 = vld [vmem:[%s3 + $0x8] sm:$0xff]
    %v128 = vld [vmem:[%s3 + $0x10] sm:$0xff]
    %v129 = vld [vmem:[%s3 + $0x18] sm:$0xff]
    %v130 = vld [vmem:[%s3 + $0x20] sm:$0xff]
    %v131 = vld [vmem:[%s3 + $0x28] sm:$0xff]
    %v132 = vld [vmem:[%s3 + $0x30] sm:$0xff]
    %v133 = vld [vmem:[%s3 + $0x38] sm:$0xff]
    %v134 = vld [vmem:[%s3 + $0x40] sm:$0xff]
    %v135 = vld [vmem:[%s3 + $0x48] sm:$0xff]
    %v136 = vld [vmem:[%s3 + $0x50] sm:$0xff]
    %v137 = vld [vmem:[%s3 + $0x58] sm:$0xff]
    %v138 = vld [vmem:[%s3 + $0x60] sm:$0xff]
    %v139 = vld [vmem:[%s3 + $0x68] sm:$0xff]
    %v140 = vld [vmem:[%s3 + $0x70] sm:$0xff]
    %v141 = vld [vmem:[%s3 + $0x78] sm:$0xff]
    %v142 = vld [vmem:[%s4] sm:$0x1]
    %v144 = vlaneseq
    %v145 = vshrl.u32 %v144, 7
    %v146 = vsub.s32 0, %v145
    %v147 = vrot.slane %v142, %v146
    %149 = vmatprep.subr.mxu0 0.0
    %150 = vmatpush1.msra.mxu0 %v126
    %151 = vmatprep.subr.mxu0 0.0
    %152 = vmatpush1.msra.mxu0 %v127
    %153 = vmatprep.subr.mxu0 0.0
    %154 = vmatpush1.msra.mxu0 %v128
    %155 = vmatprep.subr.mxu0 0.0
    %156 = vmatpush1.msra.mxu0 %v129
    %157 = vmatprep.subr.mxu0 0.0
    %158 = vmatpush1.msra.mxu0 %v130
    %159 = vmatprep.subr.mxu0 0.0
    %160 = vmatpush1.msra.mxu0 %v131
    %161 = vmatprep.subr.mxu0 0.0
    %162 = vmatpush1.msra.mxu0 %v132
    %163 = vmatprep.subr.mxu0 0.0
    %164 = vmatpush1.msra.mxu0 %v133
    %165 = vmatprep.subr.mxu0 0.0
    %166 = vmatpush1.msra.mxu0 %v134
    %167 = vmatprep.subr.mxu0 0.0
    %168 = vmatpush1.msra.mxu0 %v135
    %169 = vmatprep.subr.mxu0 0.0
    %170 = vmatpush1.msra.mxu0 %v136
    %171 = vmatprep.subr.mxu0 0.0
    %172 = vmatpush1.msra.mxu0 %v137
    %173 = vmatprep.subr.mxu0 0.0
    %174 = vmatpush1.msra.mxu0 %v138
    %175 = vmatprep.subr.mxu0 0.0
    %176 = vmatpush1.msra.mxu0 %v139
    %177 = vmatprep.subr.mxu0 0.0
    %178 = vmatpush1.msra.mxu0 %v140
    %179 = vmatprep.subr.mxu0 0.0
    %180 = vmatpush1.msra.mxu0 %v141
    %181 = vmatprep.subr.mxu0 0.0
    %182 = vmatpush1.msra.mxu0 0.0
    %183 = vmatprep.subr.mxu0 0.0
    %184 = vmatpush1.msra.mxu0 0.0
    %185 = vmatprep.subr.mxu0 0.0
    %186 = vmatpush1.msra.mxu0 0.0
    %187 = vmatprep.subr.mxu0 0.0
    %188 = vmatpush1.msra.mxu0 0.0
    %189 = vmatprep.subr.mxu0 0.0
    %190 = vmatpush1.msra.mxu0 0.0
    %191 = vmatprep.subr.mxu0 0.0
    %192 = vmatpush1.msra.mxu0 0.0
    %193 = vmatprep.subr.mxu0 0.0
    %194 = vmatpush1.msra.mxu0 0.0
    %195 = vmatprep.subr.mxu0 0.0
    %196 = vmatpush1.msra.mxu0 0.0
    %197 = vmatprep.subr.mxu0 0.0
    %198 = vmatpush1.msra.mxu0 0.0
    %199 = vmatprep.subr.mxu0 0.0
    %200 = vmatpush1.msra.mxu0 0.0
    %201 = vmatprep.subr.mxu0 0.0
    %202 = vmatpush1.msra.mxu0 0.0
    %203 = vmatprep.subr.mxu0 0.0
    %204 = vmatpush1.msra.mxu0 0.0
    %205 = vmatprep.subr.mxu0 0.0
    %206 = vmatpush1.msra.mxu0 0.0
    %207 = vmatprep.subr.mxu0 0.0
    %208 = vmatpush1.msra.mxu0 0.0
    %209 = vmatprep.subr.mxu0 0.0
    %210 = vmatpush1.msra.mxu0 0.0
    %211 = vmatprep.subr.mxu0 0.0
    %212 = vmatpush1.msra.mxu0 0.0
    %213 = vmatprep.mubr.f32.mxu0 0.0
    %214 = vmatmul.mubr.f32.gmra.mrb[0].mxu0 %v124
    %v215 = vpop.f32.mrb[0].mxu0
    %v216 = vadd.f32 %v147, %v215
    %v217 = vpop.f32.mrb[0].mxu0
    %218 = vmatprep.mubr.f32.mxu0 0.0
    %219 = vmatmul.mubr.f32.gmra.mrb[0].mxu0 %v125
    %v220 = vpop.f32.mrb[0].mxu0
    %v221 = vadd.f32 %v147, %v220
    %v222 = vpop.f32.mrb[0].mxu0
    %223 = vdwg.mxu0
    %224 = vst.msk [vmem:[#allocation2] sm:$0xff] %vm34, %v216
    %225 = vst.msk [vmem:[#allocation2 + $0x8] sm:$0xff] %vm34, %v221
    // Predicated region
    $region22: #{mlp_forward.1} parent=1 // pred_check
      _
    $region23: #{mlp_forward.1} parent=1 // pred_check_branch
      %227 = sbr.rel (0) target = $region25
    $region24: #{mlp_forward.1} parent=1 // pred_region
      %s229 = ssub.s32 256, 256
      %230 = vsyncadd [#allocation3], %s229
      %s231 = sshll.u32 [#allocation2], 4
      %s232 = int_to_ptr.vmem [resolvable:$true] %s231
      %237 = dma.vmem_to_hbm [thread:$0]  %s232, 256, %s5, [#allocation3], 128, 128, 8
    $region25: #{mlp_forward.1} parent=1 // pred_fallthru
      _
    // Predicated region
    $region26: #{mlp_forward.1} parent=1 // pred_check
      _
    $region27: #{mlp_forward.1} parent=1 // pred_check_branch
      %239 = sbr.rel (0) target = $region29
    $region28: #{mlp_forward.1} parent=1 // pred_region
      %240 = dma.done [#allocation3], 256
    $region29: #{mlp_forward.1} parent=1 // pred_fallthru
      _
    %241 = vsyncpa [#allocation3], 1

</llo_original>
